<compile_context>
chip_gen: v7x
topology: tpu7x:2x2x1
jax: 0.10.0
libtpu: 0.0.40
codegen_flags: <defaults>
</compile_context>

<pallas_src>
import math

import jax
import jax.numpy as jnp
from jax.experimental import pallas as pl
from jax.experimental.pallas import tpu as pltpu

LN_EPS = 1e-5


def linear_per_metapath_kernel(alpha_ref, x_ref, w_ref, b_ref, g_ref, beta_ref, o_ref):
    # x_ref: (TB, C*M); w_ref: (C*M, C*N) block-diagonal; b/g/beta: (1, C*N); o_ref: (TB, C*N)
    # Single lane-dense MXU matmul; inputs kept in native dtype (bf16 runs at
    # full MXU rate), accumulation in float32.
    out = jnp.dot(x_ref[...], w_ref[...], preferred_element_type=jnp.float32)
    out = out + b_ref[...]                                  # params pre-cast to f32 in wrapper

    # LayerNorm over (num_metapaths, out_dim) jointly == row-wise over the
    # flattened C*N lane axis (clean lane reduction, no cross-sublane traffic).
    mean = jnp.mean(out, axis=-1, keepdims=True)
    var = jnp.mean(jnp.square(out - mean), axis=-1, keepdims=True)
    out = (out - mean) * jax.lax.rsqrt(var + LN_EPS)
    out = out * g_ref[...] + beta_ref[...]

    # PReLU with a single shared slope (nn.PReLU() default: one parameter).
    alpha = alpha_ref[0]
    out = jnp.where(out >= 0, out, alpha * out)

    # TODO(synk): Dropout omitted (identity, i.e. eval/inference mode).
    o_ref[...] = out.astype(o_ref.dtype)


def _pick_tb(B):
    """Largest multiple-of-8 batch tile <= 1024 rows giving >= 4 (else >= 2) grid steps."""
    for min_steps in (4, 2):
        best = None
        for cand in range(8, min(B, 1024) + 1, 8):
            if B % cand == 0 and B // cand >= min_steps:
                best = cand
        if best is not None:
            return best
    return B  # tiny / awkward B: single full-size block


def linear_per_metapath(x, W, bias, gamma, beta, prelu_alpha, *, tb=None):
    B, C, M = x.shape
    Cw, Mw, N = W.shape
    assert (Cw, Mw) == (C, M)
    CM, CN = C * M, C * N

    if tb is None:
        tb = _pick_tb(B)
    assert B % tb == 0 and (tb == B or tb % 8 == 0)
    grid = (B // tb,)

    # Flatten the metapath axis into lanes (done once by XLA, outside the kernel).
    x_flat = x.reshape(B, CM)
    # Block-diagonal weight: W_bd[c*M + m, d*N + n] = W[c, m, n] * (c == d).
    eye_c = jnp.eye(C, dtype=W.dtype)
    w_bd = (W[:, :, None, :] * eye_c[:, None, :, None]).reshape(CM, CN)
    # Lane-aligned, pre-cast f32 per-channel params (bias / LN gamma / LN beta).
    b_flat = bias.reshape(1, CN).astype(jnp.float32)
    g_flat = gamma.reshape(1, CN).astype(jnp.float32)
    beta_flat = beta.reshape(1, CN).astype(jnp.float32)
    alpha = jnp.asarray(prelu_alpha, jnp.float32).reshape((1,))

    out_flat = pl.pallas_call(
        linear_per_metapath_kernel,
        out_shape=jax.ShapeDtypeStruct((B, CN), x.dtype),
        grid_spec=pltpu.PrefetchScalarGridSpec(
            num_scalar_prefetch=0,
            grid=grid,
            in_specs=[
                pl.BlockSpec(memory_space=pltpu.MemorySpace.SMEM),  # PReLU alpha (scalar)
                pl.BlockSpec((tb, CM), lambda i: (i, 0)),           # x tile (pipelined)
                # Grid-invariant operands: constant block index -> fetched once,
                # never re-DMA'd across grid steps; tiny, so the default
                # double-buffer allocation is negligible VMEM cost here.
                pl.BlockSpec((CM, CN), lambda i: (0, 0)),           # block-diagonal W
                pl.BlockSpec((1, CN), lambda i: (0, 0)),            # bias
                pl.BlockSpec((1, CN), lambda i: (0, 0)),            # LN gamma
                pl.BlockSpec((1, CN), lambda i: (0, 0)),            # LN beta
            ],
            out_specs=pl.BlockSpec((tb, CN), lambda i: (i, 0)),     # lane-dense output
        ),
        compiler_params=pltpu.CompilerParams(
            dimension_semantics=("parallel",),   # multi-step batch axis -> megacore sharding
            vmem_limit_bytes=32 * 1024 * 1024,   # above v5e/v6e scoped default, safe on v7x
        ),
    )(alpha, x_flat, w_bd, b_flat, g_flat, beta_flat)

    return out_flat.reshape(B, C, N)


def reference(x, W, bias, gamma, beta, alpha):
    out = jnp.einsum('bcm,cmn->bcn', x, W) + bias[None]
    mean = jnp.mean(out, axis=(1, 2), keepdims=True)
    var = jnp.mean(jnp.square(out - mean), axis=(1, 2), keepdims=True)
    out = (out - mean) / jnp.sqrt(var + LN_EPS)
    out = out * gamma[None] + beta[None]
    return jnp.where(out >= 0, out, alpha * out)


if __name__ == "__main__":
    # Small but multi-tile: C*M = C*N = 128 (exactly one full lane width),
    # B=256 with tb=64 -> grid=(4,) so the x/out DMAs pipeline.
    B, num_metapaths, in_dim, out_dim = 256, 4, 32, 32

    key = jax.random.PRNGKey(0)
    kx, kw = jax.random.split(key)

    x = jax.random.normal(kx, (B, num_metapaths, in_dim), dtype=jnp.float32)

    # Deterministic parameter init (synthetic; mirrors shapes in __init__).
    # xavier_uniform_ with gain for 'relu' (sqrt(2)); fan_in/out over last two dims.
    gain = math.sqrt(2.0)
    bound = gain * math.sqrt(6.0 / (in_dim + out_dim))
    W = jax.random.uniform(kw, (num_metapaths, in_dim, out_dim),
                           minval=-bound, maxval=bound, dtype=jnp.float32)
    bias = jnp.zeros((num_metapaths, out_dim), jnp.float32)
    gamma = jnp.ones((num_metapaths, out_dim), jnp.float32)   # LayerNorm weight
    beta = jnp.zeros((num_metapaths, out_dim), jnp.float32)   # LayerNorm bias
    prelu_alpha = 0.25                                        # nn.PReLU() default init

    out = linear_per_metapath(x, W, bias, gamma, beta, prelu_alpha, tb=64)
    out = jax.block_until_ready(out)

    ref = reference(x, W, bias, gamma, beta, prelu_alpha)
    assert out.shape == (B, num_metapaths, out_dim)
    assert jnp.allclose(out, ref, atol=1e-4, rtol=1e-4)

    print("KERNEL_OK")
</pallas_src>

<mosaic_0001>
module attributes {stable_mosaic.version = 11 : i64} {
  func.func @linear_per_metapath_kernel(%arg0: i32, %arg1: memref<1xf32, #tpu.memory_space<smem>>, %arg2: memref<64x128xf32, #tpu.memory_space<vmem>>, %arg3: memref<128x128xf32, #tpu.memory_space<vmem>>, %arg4: memref<1x128xf32, #tpu.memory_space<vmem>>, %arg5: memref<1x128xf32, #tpu.memory_space<vmem>>, %arg6: memref<1x128xf32, #tpu.memory_space<vmem>>, %arg7: memref<64x128xf32, #tpu.memory_space<vmem>>) attributes {dimension_semantics = [#tpu.dimension_semantics<parallel>], iteration_bounds = array<i64: 4>, scalar_prefetch = 0 : i64, scratch_operands = 0 : i64, tpu.core_type = #tpu.core_type<tc>, window_params = [{transform_indices = @transform_0, window_bounds = array<i64: 1>}, {transform_indices = @transform_1, window_bounds = array<i64: 64, 128>}, {pipeline_mode = #tpu.pipeline_mode<synchronous>, transform_indices = @transform_2, window_bounds = array<i64: 128, 128>}, {pipeline_mode = #tpu.pipeline_mode<synchronous>, transform_indices = @transform_3, window_bounds = array<i64: 1, 128>}, {pipeline_mode = #tpu.pipeline_mode<synchronous>, transform_indices = @transform_4, window_bounds = array<i64: 1, 128>}, {pipeline_mode = #tpu.pipeline_mode<synchronous>, transform_indices = @transform_5, window_bounds = array<i64: 1, 128>}, {transform_indices = @transform_6, window_bounds = array<i64: 64, 128>}]} {
    %c0 = arith.constant 0 : index
    %c0_0 = arith.constant 0 : index
    %0 = vector.load %arg2[%c0, %c0_0] : memref<64x128xf32, #tpu.memory_space<vmem>>, vector<64x128xf32>
    %c0_1 = arith.constant 0 : index
    %c0_2 = arith.constant 0 : index
    %1 = vector.load %arg3[%c0_1, %c0_2] : memref<128x128xf32, #tpu.memory_space<vmem>>, vector<128x128xf32>
    %cst = arith.constant dense<0.000000e+00> : vector<64x128xf32>
    %2 = tpu.matmul %0, %1, %cst {dimension_numbers = #tpu.dot_dimension_numbers<[1], [0], [0], [1], [0, 0, 1, 1], [], []>} : vector<64x128xf32>, vector<128x128xf32>, vector<64x128xf32> -> vector<64x128xf32>
    %c0_3 = arith.constant 0 : index
    %c0_4 = arith.constant 0 : index
    %3 = vector.load %arg4[%c0_3, %c0_4] : memref<1x128xf32, #tpu.memory_space<vmem>>, vector<1x128xf32>
    %4 = vector.broadcast %3 : vector<1x128xf32> to vector<64x128xf32>
    %5 = arith.addf %2, %4 : vector<64x128xf32>
    %cst_5 = arith.constant dense<0.000000e+00> : vector<64xf32>
    %6 = vector.multi_reduction <add>, %5, %cst_5 [1] : vector<64x128xf32> to vector<64xf32>
    %7 = vector.shape_cast %6 : vector<64xf32> to vector<64x1xf32>
    %cst_6 = arith.constant 1.280000e+02 : f32
    %8 = vector.broadcast %cst_6 : f32 to vector<64x1xf32>
    %9 = arith.divf %7, %8 : vector<64x1xf32>
    %10 = vector.broadcast %9 : vector<64x1xf32> to vector<64x128xf32>
    %11 = arith.subf %5, %10 : vector<64x128xf32>
    %12 = arith.mulf %11, %11 : vector<64x128xf32>
    %cst_7 = arith.constant dense<0.000000e+00> : vector<64xf32>
    %13 = vector.multi_reduction <add>, %12, %cst_7 [1] : vector<64x128xf32> to vector<64xf32>
    %14 = vector.shape_cast %13 : vector<64xf32> to vector<64x1xf32>
    %cst_8 = arith.constant 1.280000e+02 : f32
    %15 = vector.broadcast %cst_8 : f32 to vector<64x1xf32>
    %16 = arith.divf %14, %15 : vector<64x1xf32>
    %17 = vector.broadcast %9 : vector<64x1xf32> to vector<64x128xf32>
    %18 = arith.subf %5, %17 : vector<64x128xf32>
    %cst_9 = arith.constant 9.99999974E-6 : f32
    %19 = vector.broadcast %cst_9 : f32 to vector<64x1xf32>
    %20 = arith.addf %16, %19 : vector<64x1xf32>
    %21 = math.rsqrt %20 : vector<64x1xf32>
    %22 = vector.broadcast %21 : vector<64x1xf32> to vector<64x128xf32>
    %23 = arith.mulf %18, %22 : vector<64x128xf32>
    %c0_10 = arith.constant 0 : index
    %c0_11 = arith.constant 0 : index
    %24 = vector.load %arg5[%c0_10, %c0_11] : memref<1x128xf32, #tpu.memory_space<vmem>>, vector<1x128xf32>
    %25 = vector.broadcast %24 : vector<1x128xf32> to vector<64x128xf32>
    %26 = arith.mulf %23, %25 : vector<64x128xf32>
    %c0_12 = arith.constant 0 : index
    %c0_13 = arith.constant 0 : index
    %27 = vector.load %arg6[%c0_12, %c0_13] : memref<1x128xf32, #tpu.memory_space<vmem>>, vector<1x128xf32>
    %28 = vector.broadcast %27 : vector<1x128xf32> to vector<64x128xf32>
    %29 = arith.addf %26, %28 : vector<64x128xf32>
    %c0_14 = arith.constant 0 : index
    %30 = memref.load %arg1[%c0_14] : memref<1xf32, #tpu.memory_space<smem>>
    %cst_15 = arith.constant 0.000000e+00 : f32
    %31 = vector.broadcast %cst_15 : f32 to vector<64x128xf32>
    %32 = arith.cmpf oge, %29, %31 : vector<64x128xf32>
    %33 = vector.broadcast %30 : f32 to vector<64x128xf32>
    %34 = arith.mulf %33, %29 : vector<64x128xf32>
    %35 = arith.select %32, %29, %34 : vector<64x128xi1>, vector<64x128xf32>
    %c0_16 = arith.constant 0 : index
    %c0_17 = arith.constant 0 : index
    %36 = vector.load %arg7[%c0_16, %c0_17] : memref<64x128xf32, #tpu.memory_space<vmem>>, vector<64x128xf32>
    tpu.vector_store %arg7[%c0_16, %c0_17], %35 {strides = array<i32>} : memref<64x128xf32, #tpu.memory_space<vmem>>, vector<64x128xf32>,
    return
  }
  func.func @transform_0(%arg0: i32) -> i32 {
    %c0_i32 = arith.constant 0 : i32
    %c0_i32_0 = arith.constant 0 : i32
    return %c0_i32 : i32
  }
  func.func @transform_1(%arg0: i32) -> (i32, i32) {
    %c0_i32 = arith.constant 0 : i32
    %c0_i32_0 = arith.constant 0 : i32
    return %arg0, %c0_i32 : i32, i32
  }
  func.func @transform_2(%arg0: i32) -> (i32, i32) {
    %c0_i32 = arith.constant 0 : i32
    %c0_i32_0 = arith.constant 0 : i32
    %c0_i32_1 = arith.constant 0 : i32
    return %c0_i32, %c0_i32_0 : i32, i32
  }
  func.func @transform_3(%arg0: i32) -> (i32, i32) {
    %c0_i32 = arith.constant 0 : i32
    %c0_i32_0 = arith.constant 0 : i32
    %c0_i32_1 = arith.constant 0 : i32
    return %c0_i32, %c0_i32_0 : i32, i32
  }
  func.func @transform_4(%arg0: i32) -> (i32, i32) {
    %c0_i32 = arith.constant 0 : i32
    %c0_i32_0 = arith.constant 0 : i32
    %c0_i32_1 = arith.constant 0 : i32
    return %c0_i32, %c0_i32_0 : i32, i32
  }
  func.func @transform_5(%arg0: i32) -> (i32, i32) {
    %c0_i32 = arith.constant 0 : i32
    %c0_i32_0 = arith.constant 0 : i32
    %c0_i32_1 = arith.constant 0 : i32
    return %c0_i32, %c0_i32_0 : i32, i32
  }
  func.func @transform_6(%arg0: i32) -> (i32, i32) {
    %c0_i32 = arith.constant 0 : i32
    %c0_i32_0 = arith.constant 0 : i32
    return %arg0, %c0_i32 : i32, i32
  }
}

</mosaic_0001>

<llo_original>
// kernel: tpu_custom_call.1
$region0: #{tpu_custom_call.1}
  #allocation0 [shape = 'u32[]', space=smem, size = 0x4, offset = 0x4, fixed_abs, tag = 'smem constant byte address 0x4 - core index']
  #allocation1 [shape = 'u32[144,128]{1,0:T(1,128)}', space=vmem, size = 0x12000, scoped, tag = 'internal scratch']
  #allocation2 [shape = 'f32[1]{0:T(128)S(6)}', space=smem, size = 0x200, scoped, tag = 'scoped memory for tpu_custom_call.1']
  %s0 = inlined_call_operand.<no memory space> [shape: f32[1], index: 0, kind: input, shape index: {}]
  %s1 = inlined_call_operand.hbm [shape: f32[256,128], index: 1, kind: input, shape index: {}]
  %s2 = inlined_call_operand.hbm [shape: f32[128,128], index: 2, kind: input, shape index: {}]
  %s3 = inlined_call_operand.vmem [shape: f32[1,128], index: 3, kind: input, shape index: {}]
  %s4 = inlined_call_operand.vmem [shape: f32[1,128], index: 4, kind: input, shape index: {}]
  %s5 = inlined_call_operand.vmem [shape: f32[1,128], index: 5, kind: input, shape index: {}]
  %s6 = inlined_call_operand.hbm [shape: f32[256,128], index: 6, kind: output, shape index: {}]
  %s7 = sld [smem:[#allocation0]]
  $region65: #{tpu_custom_call.1} parent=0
    _
  %s9 = ssub.s32 1, %s7
  %s10 = scalar_select 0, %s9, %s7
  %11 = sst [smem:[#allocation2]] %s0
  $region1: #{tpu_custom_call.1} parent=0
    #allocation3 [shape = 'u8[65536]{0}', space=vmem, size = 0x10000, scoped, tag = 'input window, operand 1']
    #allocation4 [shape = 's32[2]{0}', space=sflag, size = 0x8, scoped, tag = 'scoped memory for tpu_custom_call.1']
    #allocation5 [shape = 's32[2]{0}', space=sflag, size = 0x8, scoped, tag = 'scoped memory for tpu_custom_call.1']
    #allocation6 [shape = 'u8[65536]{0}', space=vmem, size = 0x10000, scoped, tag = 'input window, operand 2, single buffered']
    #allocation7 [shape = 's32[1]{0}', space=sflag, size = 0x4, scoped, tag = 'scoped memory for tpu_custom_call.1']
    #allocation8 [shape = 'u8[65536]{0}', space=vmem, size = 0x10000, scoped, tag = 'output window, operand 0']
    %12 = vsyncpa [#allocation4], 0
    %s13 = scalar_lea.sflag [#allocation4], 1
    %14 = vsyncpa %s13, 0
    %15 = vsyncpa [#allocation7], 0
    %16 = vsyncpa [#allocation5], 0
    %s17 = scalar_lea.sflag [#allocation5], 1
    %18 = vsyncpa %s17, 0
    loop: start=0, step=1, limit=6
    $region2: #{tpu_custom_call.1} parent=1 // loop_pre_header
      _
    $region3: #{tpu_custom_call.1} parent=1 // loop_header
      %s20 = sphi 0, %s24
      %p21 = scmp.ge.s32.totalorder %s20, 6
      %s28 = sphi 0, %s28
      %s30 = sphi 0, %s28
      %s31 = sphi 0, %s30
      %s45 = sphi 0, %s31
      %s51 = sphi 0, %s53
      %s54 = sphi 0, %s51
      %s55 = sphi 0, %s54
      %s71 = sphi 0, %s55
      %s75 = sphi 0, %s75
      %s77 = sphi 0, %s75
      %s78 = sphi 0, %s77
      %s92 = sphi 0, %s78
      %s96 = sphi 0, %s96
      %s98 = sphi 0, %s96
      %s99 = sphi 0, %s98
      %s113 = sphi 0, %s99
      %s117 = sphi 0, %s117
      %s119 = sphi 0, %s117
      %s120 = sphi 0, %s119
      %s134 = sphi 0, %s120
      %s138 = sphi 0, %s138
      %s140 = sphi 0, %s138
      %s141 = sphi 0, %s140
      %s155 = sphi 0, %s141
      %s161 = sphi 0, %s163
      %s164 = sphi 0, %s161
      %s165 = sphi 0, %s164
      %s181 = sphi 0, %s165
    $region4: #{tpu_custom_call.1} parent=1 // loop_header_branch
      %23 = sbr.rel (%p21) target = $region8
    $region5: #{tpu_custom_call.1} parent=1 // loop_body
      %s25 = ssub.s32 %s20, 1
      %s26 = ssub.s32 %s20, 2
      %s27 = sadd.s32 %s20, 1
      %s29 = sadd.s32 %s28, 1
      %p32 = scmp.eq.s32.totalorder %s20, 3
      %p33 = scmp.ne.s32.totalorder %s28, %s30
      %p34 = scmp.eq.s32.totalorder %s20, 0
      %p35 = por %p33, %p34
      %p36 = scmp.ne.s32.totalorder %s28, %s30
      %p37 = scmp.eq.s32.totalorder %s25, 3
      %p38 = por %p36, %p37
      %p39 = scmp.ne.s32.totalorder %s30, %s31
      %p40 = scmp.eq.s32.totalorder %s25, 0
      %p41 = por %p39, %p40
      %p42 = scmp.ne.s32.totalorder %s30, %s31
      %p43 = scmp.eq.s32.totalorder %s26, 3
      %p44 = por %p42, %p43
      %p46 = scmp.ne.s32.totalorder %s31, %s45
      %p47 = scmp.eq.s32.totalorder %s26, 0
      %p48 = por %p46, %p47
      %s49 = ssub.s32 %s20, %s27
      %p50 = scmp.eq.s32.totalorder %s49, 0
      %s52 = sadd.s32 %s51, 1
      %s53 = scalar_select %p50, %s51, %s52
      %p56 = pneg %p50
      %p57 = scmp.eq.s32.totalorder %s20, 3
      %p58 = por %p56, %p57
      %p59 = scmp.ne.s32.totalorder %s51, %s54
      %p60 = scmp.eq.s32.totalorder %s20, 0
      %p61 = por %p59, %p60
      %p62 = scmp.ne.s32.totalorder %s51, %s54
      %p63 = scmp.eq.s32.totalorder %s25, 3
      %p64 = por %p62, %p63
      %p65 = scmp.ne.s32.totalorder %s54, %s55
      %p66 = scmp.eq.s32.totalorder %s25, 0
      %p67 = por %p65, %p66
      %p68 = scmp.ne.s32.totalorder %s54, %s55
      %p69 = scmp.eq.s32.totalorder %s26, 3
      %p70 = por %p68, %p69
      %p72 = scmp.ne.s32.totalorder %s55, %s71
      %p73 = scmp.eq.s32.totalorder %s26, 0
      %p74 = por %p72, %p73
      %s76 = sadd.s32 %s75, 1
      %p79 = scmp.eq.s32.totalorder %s20, 3
      %p80 = scmp.ne.s32.totalorder %s75, %s77
      %p81 = scmp.eq.s32.totalorder %s20, 0
      %p82 = por %p80, %p81
      %p83 = scmp.ne.s32.totalorder %s75, %s77
      %p84 = scmp.eq.s32.totalorder %s25, 3
      %p85 = por %p83, %p84
      %p86 = scmp.ne.s32.totalorder %s77, %s78
      %p87 = scmp.eq.s32.totalorder %s25, 0
      %p88 = por %p86, %p87
      %p89 = scmp.ne.s32.totalorder %s77, %s78
      %p90 = scmp.eq.s32.totalorder %s26, 3
      %p91 = por %p89, %p90
      %p93 = scmp.ne.s32.totalorder %s78, %s92
      %p94 = scmp.eq.s32.totalorder %s26, 0
      %p95 = por %p93, %p94
      %s97 = sadd.s32 %s96, 1
      %p100 = scmp.eq.s32.totalorder %s20, 3
      %p101 = scmp.ne.s32.totalorder %s96, %s98
      %p102 = scmp.eq.s32.totalorder %s20, 0
      %p103 = por %p101, %p102
      %p104 = scmp.ne.s32.totalorder %s96, %s98
      %p105 = scmp.eq.s32.totalorder %s25, 3
      %p106 = por %p104, %p105
      %p107 = scmp.ne.s32.totalorder %s98, %s99
      %p108 = scmp.eq.s32.totalorder %s25, 0
      %p109 = por %p107, %p108
      %p110 = scmp.ne.s32.totalorder %s98, %s99
      %p111 = scmp.eq.s32.totalorder %s26, 3
      %p112 = por %p110, %p111
      %p114 = scmp.ne.s32.totalorder %s99, %s113
      %p115 = scmp.eq.s32.totalorder %s26, 0
      %p116 = por %p114, %p115
      %s118 = sadd.s32 %s117, 1
      %p121 = scmp.eq.s32.totalorder %s20, 3
      %p122 = scmp.ne.s32.totalorder %s117, %s119
      %p123 = scmp.eq.s32.totalorder %s20, 0
      %p124 = por %p122, %p123
      %p125 = scmp.ne.s32.totalorder %s117, %s119
      %p126 = scmp.eq.s32.totalorder %s25, 3
      %p127 = por %p125, %p126
      %p128 = scmp.ne.s32.totalorder %s119, %s120
      %p129 = scmp.eq.s32.totalorder %s25, 0
      %p130 = por %p128, %p129
      %p131 = scmp.ne.s32.totalorder %s119, %s120
      %p132 = scmp.eq.s32.totalorder %s26, 3
      %p133 = por %p131, %p132
      %p135 = scmp.ne.s32.totalorder %s120, %s134
      %p136 = scmp.eq.s32.totalorder %s26, 0
      %p137 = por %p135, %p136
      %s139 = sadd.s32 %s138, 1
      %p142 = scmp.eq.s32.totalorder %s20, 3
      %p143 = scmp.ne.s32.totalorder %s138, %s140
      %p144 = scmp.eq.s32.totalorder %s20, 0
      %p145 = por %p143, %p144
      %p146 = scmp.ne.s32.totalorder %s138, %s140
      %p147 = scmp.eq.s32.totalorder %s25, 3
      %p148 = por %p146, %p147
      %p149 = scmp.ne.s32.totalorder %s140, %s141
      %p150 = scmp.eq.s32.totalorder %s25, 0
      %p151 = por %p149, %p150
      %p152 = scmp.ne.s32.totalorder %s140, %s141
      %p153 = scmp.eq.s32.totalorder %s26, 3
      %p154 = por %p152, %p153
      %p156 = scmp.ne.s32.totalorder %s141, %s155
      %p157 = scmp.eq.s32.totalorder %s26, 0
      %p158 = por %p156, %p157
      %s159 = ssub.s32 %s20, %s27
      %p160 = scmp.eq.s32.totalorder %s159, 0
      %s162 = sadd.s32 %s161, 1
      %s163 = scalar_select %p160, %s161, %s162
      %p166 = pneg %p160
      %p167 = scmp.eq.s32.totalorder %s20, 3
      %p168 = por %p166, %p167
      %p169 = scmp.ne.s32.totalorder %s161, %s164
      %p170 = scmp.eq.s32.totalorder %s20, 0
      %p171 = por %p169, %p170
      %p172 = scmp.ne.s32.totalorder %s161, %s164
      %p173 = scmp.eq.s32.totalorder %s25, 3
      %p174 = por %p172, %p173
      %p175 = scmp.ne.s32.totalorder %s164, %s165
      %p176 = scmp.eq.s32.totalorder %s25, 0
      %p177 = por %p175, %p176
      %p178 = scmp.ne.s32.totalorder %s164, %s165
      %p179 = scmp.eq.s32.totalorder %s26, 3
      %p180 = por %p178, %p179
      %p182 = scmp.ne.s32.totalorder %s165, %s181
      %p183 = scmp.eq.s32.totalorder %s26, 0
      %p184 = por %p182, %p183
      %p185 = scmp.le.s32.totalorder 1, %s20
      %p186 = scmp.lt.s32.totalorder %s20, 5
      %p187 = pnand %p185, %p186
      %p188 = pneg %p187
      // Predicated region
      $region9: #{tpu_custom_call.1} parent=5 // pred_check
        _
      $region10: #{tpu_custom_call.1} parent=5 // pred_check_branch
        %190 = sbr.rel (%p187) target = $region12
      $region11: #{tpu_custom_call.1} parent=5 // pred_region
        %s191 = ssub.s32 %s20, 1
        // Predicated region
        $region13: #{tpu_custom_call.1} parent=11 // pred_check
          %p192 = pneg %p41
        $region14: #{tpu_custom_call.1} parent=11 // pred_check_branch
          %194 = sbr.rel (%p192) target = $region16
        $region15: #{tpu_custom_call.1} parent=11 // pred_region
          _
        $region16: #{tpu_custom_call.1} parent=11 // pred_fallthru
          _
        // Predicated region
        $region17: #{tpu_custom_call.1} parent=11 // pred_check
          %p195 = pneg %p88
        $region18: #{tpu_custom_call.1} parent=11 // pred_check_branch
          %197 = sbr.rel (%p195) target = $region20
        $region19: #{tpu_custom_call.1} parent=11 // pred_region
          %s199 = ssub.s32 2048, 2048
          %200 = vsyncadd [#allocation7], %s199
          %s201 = sshll.u32 [#allocation6], 4
          %s202 = int_to_ptr.vmem [resolvable:$true] %s201
          %207 = dma.hbm_to_vmem [thread:$0]  %s2, 2048, %s202, [#allocation7], 128, 128, 8
        $region20: #{tpu_custom_call.1} parent=11 // pred_fallthru
          _
        // Predicated region
        $region21: #{tpu_custom_call.1} parent=11 // pred_check
          %p208 = pneg %p109
        $region22: #{tpu_custom_call.1} parent=11 // pred_check_branch
          %210 = sbr.rel (%p208) target = $region24
        $region23: #{tpu_custom_call.1} parent=11 // pred_region
          _
        $region24: #{tpu_custom_call.1} parent=11 // pred_fallthru
          _
        // Predicated region
        $region25: #{tpu_custom_call.1} parent=11 // pred_check
          %p211 = pneg %p130
        $region26: #{tpu_custom_call.1} parent=11 // pred_check_branch
          %213 = sbr.rel (%p211) target = $region28
        $region27: #{tpu_custom_call.1} parent=11 // pred_region
          _
        $region28: #{tpu_custom_call.1} parent=11 // pred_fallthru
          _
        // Predicated region
        $region29: #{tpu_custom_call.1} parent=11 // pred_check
          %p214 = pneg %p151
        $region30: #{tpu_custom_call.1} parent=11 // pred_check_branch
          %216 = sbr.rel (%p214) target = $region32
        $region31: #{tpu_custom_call.1} parent=11 // pred_region
          _
        $region32: #{tpu_custom_call.1} parent=11 // pred_fallthru
          _
      $region12: #{tpu_custom_call.1} parent=5 // pred_fallthru
        _
      %p217 = scmp.lt.s32.totalorder %s20, 4
      // Predicated region
      $region33: #{tpu_custom_call.1} parent=5 // pred_check
        %p218 = pneg %p217
      $region34: #{tpu_custom_call.1} parent=5 // pred_check_branch
        %220 = sbr.rel (%p218) target = $region36
      $region35: #{tpu_custom_call.1} parent=5 // pred_region
        // Predicated region
        $region37: #{tpu_custom_call.1} parent=35 // pred_check
          %p221 = pneg %p61
        $region38: #{tpu_custom_call.1} parent=35 // pred_check_branch
          %223 = sbr.rel (%p221) target = $region40
        $region39: #{tpu_custom_call.1} parent=35 // pred_region
          %s224 = sand.u32 %s51, 1
          %s225 = scalar_lea.sflag [#allocation4], %s224
          %s226 = sand.u32 %s51, 1
          %s227 = smul.addr %s226, 64
          %s228 = scalar_lea.vmem [#allocation3], %s227
          %s229 = smul.u32 8, %s20
          %s231 = ssub.s32 1024, 1024
          %232 = vsyncadd %s225, %s231
          %s233 = smul.addr %s229, 128
          %s234 = scalar_lea.hbm %s1, %s233
          %s235 = sshll.u32 %s228, 4
          %s236 = int_to_ptr.vmem [resolvable:$true] %s235
          %241 = dma.hbm_to_vmem [thread:$0]  %s234, 1024, %s236, %s225, 128, 128, 8
        $region40: #{tpu_custom_call.1} parent=35 // pred_fallthru
          _
      $region36: #{tpu_custom_call.1} parent=5 // pred_fallthru
        _
      %p242 = scmp.le.s32.totalorder 1, %s20
      %p243 = scmp.lt.s32.totalorder %s20, 5
      %p244 = pnand %p242, %p243
      %p245 = pneg %p244
      // Predicated region
      $region41: #{tpu_custom_call.1} parent=5 // pred_check
        _
      $region42: #{tpu_custom_call.1} parent=5 // pred_check_branch
        %247 = sbr.rel (%p244) target = $region44
      $region43: #{tpu_custom_call.1} parent=5 // pred_region
        %s248 = ssub.s32 %s20, 1
        %s249 = sand.u32 %s54, 1
        %s250 = scalar_lea.sflag [#allocation4], %s249
        %s251 = sand.u32 %s54, 1
        %s252 = smul.addr %s251, 64
        %s253 = scalar_lea.vmem [#allocation3], %s252
        // Predicated region
        $region45: #{tpu_custom_call.1} parent=43 // pred_check
          %p254 = pneg %p67
        $region46: #{tpu_custom_call.1} parent=43 // pred_check_branch
          %256 = sbr.rel (%p254) target = $region48
        $region47: #{tpu_custom_call.1} parent=43 // pred_region
          %257 = dma.done %s250, 1024
        $region48: #{tpu_custom_call.1} parent=43 // pred_fallthru
          _
        // Predicated region
        $region49: #{tpu_custom_call.1} parent=43 // pred_check
          %p258 = pneg %p88
        $region50: #{tpu_custom_call.1} parent=43 // pred_check_branch
          %260 = sbr.rel (%p258) target = $region52
        $region51: #{tpu_custom_call.1} parent=43 // pred_region
          %261 = dma.done [#allocation7], 2048
        $region52: #{tpu_custom_call.1} parent=43 // pred_fallthru
          _
        %p262 = pneg %p41
        %p263 = pneg %p38
        %s264 = sand.u32 %s54, 1
        %s265 = scalar_lea.sflag [#allocation4], %s264
        %s266 = sand.u32 %s54, 1
        %s267 = smul.addr %s266, 64
        %s268 = scalar_lea.vmem [#allocation3], %s267
        %p269 = pneg %p67
        %p270 = pneg %p64
        %p271 = pneg %p88
        %p272 = pneg %p85
        %p273 = pneg %p109
        %p274 = pneg %p106
        %p275 = pneg %p130
        %p276 = pneg %p127
        %p277 = pneg %p151
        %p278 = pneg %p148
        %p279 = pneg %p177
        %p280 = pneg %p174
        %s281 = sand.u32 %s164, 1
        %s282 = scalar_lea.sflag [#allocation5], %s281
        %s283 = sand.u32 %s164, 1
        %s284 = smul.addr %s283, 64
        %s285 = scalar_lea.vmem [#allocation8], %s284
        %s286 = smul.u32 8, %s25
        %s287 = smul.u32 8, %s25
        %v288 = vld [vmem:[%s253] sm:$0xff]
        %v289 = vld [vmem:[%s253 + $0x8] sm:$0xff]
        %v290 = vld [vmem:[%s253 + $0x10] sm:$0xff]
        %v291 = vld [vmem:[%s253 + $0x18] sm:$0xff]
        %v292 = vld [vmem:[%s253 + $0x20] sm:$0xff]
        %v293 = vld [vmem:[%s253 + $0x28] sm:$0xff]
        %v294 = vld [vmem:[%s253 + $0x30] sm:$0xff]
        %v295 = vld [vmem:[%s253 + $0x38] sm:$0xff]
        %v296 = vld [vmem:[#allocation6] sm:$0xff]
        %v297 = vld [vmem:[#allocation6 + $0x8] sm:$0xff]
        %v298 = vld [vmem:[#allocation6 + $0x10] sm:$0xff]
        %v299 = vld [vmem:[#allocation6 + $0x18] sm:$0xff]
        %v300 = vld [vmem:[#allocation6 + $0x20] sm:$0xff]
        %v301 = vld [vmem:[#allocation6 + $0x28] sm:$0xff]
        %v302 = vld [vmem:[#allocation6 + $0x30] sm:$0xff]
        %v303 = vld [vmem:[#allocation6 + $0x38] sm:$0xff]
        %v304 = vld [vmem:[#allocation6 + $0x40] sm:$0xff]
        %v305 = vld [vmem:[#allocation6 + $0x48] sm:$0xff]
        %v306 = vld [vmem:[#allocation6 + $0x50] sm:$0xff]
        %v307 = vld [vmem:[#allocation6 + $0x58] sm:$0xff]
        %v308 = vld [vmem:[#allocation6 + $0x60] sm:$0xff]
        %v309 = vld [vmem:[#allocation6 + $0x68] sm:$0xff]
        %v310 = vld [vmem:[#allocation6 + $0x70] sm:$0xff]
        %v311 = vld [vmem:[#allocation6 + $0x78] sm:$0xff]
        %v312 = vld [vmem:[%s3] sm:$0x1]
        %v314 = vlaneseq
        %v315 = vshrl.u32 %v314, 7
        %v316 = vsub.s32 0, %v315
        %v317 = vrot.slane %v312, %v316
        %319 = vmatprep.subr.mxu0 0.0
        %320 = vmatpush1.msra.mxu0 %v296
        %321 = vmatprep.subr.mxu0 0.0
        %322 = vmatpush1.msra.mxu0 %v297
        %323 = vmatprep.subr.mxu0 0.0
        %324 = vmatpush1.msra.mxu0 %v298
        %325 = vmatprep.subr.mxu0 0.0
        %326 = vmatpush1.msra.mxu0 %v299
        %327 = vmatprep.subr.mxu0 0.0
        %328 = vmatpush1.msra.mxu0 %v300
        %329 = vmatprep.subr.mxu0 0.0
        %330 = vmatpush1.msra.mxu0 %v301
        %331 = vmatprep.subr.mxu0 0.0
        %332 = vmatpush1.msra.mxu0 %v302
        %333 = vmatprep.subr.mxu0 0.0
        %334 = vmatpush1.msra.mxu0 %v303
        %335 = vmatprep.subr.mxu0 0.0
        %336 = vmatpush1.msra.mxu0 %v304
        %337 = vmatprep.subr.mxu0 0.0
        %338 = vmatpush1.msra.mxu0 %v305
        %339 = vmatprep.subr.mxu0 0.0
        %340 = vmatpush1.msra.mxu0 %v306
        %341 = vmatprep.subr.mxu0 0.0
        %342 = vmatpush1.msra.mxu0 %v307
        %343 = vmatprep.subr.mxu0 0.0
        %344 = vmatpush1.msra.mxu0 %v308
        %345 = vmatprep.subr.mxu0 0.0
        %346 = vmatpush1.msra.mxu0 %v309
        %347 = vmatprep.subr.mxu0 0.0
        %348 = vmatpush1.msra.mxu0 %v310
        %349 = vmatprep.subr.mxu0 0.0
        %350 = vmatpush1.msra.mxu0 %v311
        %351 = vmatprep.subr.mxu0 0.0
        %352 = vmatpush1.msra.mxu0 0.0
        %353 = vmatprep.subr.mxu0 0.0
        %354 = vmatpush1.msra.mxu0 0.0
        %355 = vmatprep.subr.mxu0 0.0
        %356 = vmatpush1.msra.mxu0 0.0
        %357 = vmatprep.subr.mxu0 0.0
        %358 = vmatpush1.msra.mxu0 0.0
        %359 = vmatprep.subr.mxu0 0.0
        %360 = vmatpush1.msra.mxu0 0.0
        %361 = vmatprep.subr.mxu0 0.0
        %362 = vmatpush1.msra.mxu0 0.0
        %363 = vmatprep.subr.mxu0 0.0
        %364 = vmatpush1.msra.mxu0 0.0
        %365 = vmatprep.subr.mxu0 0.0
        %366 = vmatpush1.msra.mxu0 0.0
        %367 = vmatprep.subr.mxu0 0.0
        %368 = vmatpush1.msra.mxu0 0.0
        %369 = vmatprep.subr.mxu0 0.0
        %370 = vmatpush1.msra.mxu0 0.0
        %371 = vmatprep.subr.mxu0 0.0
        %372 = vmatpush1.msra.mxu0 0.0
        %373 = vmatprep.subr.mxu0 0.0
        %374 = vmatpush1.msra.mxu0 0.0
        %375 = vmatprep.subr.mxu0 0.0
        %376 = vmatpush1.msra.mxu0 0.0
        %377 = vmatprep.subr.mxu0 0.0
        %378 = vmatpush1.msra.mxu0 0.0
        %379 = vmatprep.subr.mxu0 0.0
        %380 = vmatpush1.msra.mxu0 0.0
        %381 = vmatprep.subr.mxu0 0.0
        %382 = vmatpush1.msra.mxu0 0.0
        %383 = vmatprep.mubr.f32.mxu0 0.0
        %384 = vmatmul.mubr.f32.gmra.mrb[0].mxu0 %v288
        %v385 = vpop.f32.mrb[0].mxu0
        %v386 = vadd.f32 %v317, %v385
        %v387 = vpop.f32.mrb[0].mxu0
        %388 = vmatprep.mubr.f32.mxu0 0.0
        %389 = vmatmul.mubr.f32.gmra.mrb[0].mxu0 %v289
        %v390 = vpop.f32.mrb[0].mxu0
        %v391 = vadd.f32 %v317, %v390
        %v392 = vpop.f32.mrb[0].mxu0
        %393 = vmatprep.mubr.f32.mxu0 0.0
        %394 = vmatmul.mubr.f32.gmra.mrb[0].mxu0 %v290
        %v395 = vpop.f32.mrb[0].mxu0
        %v396 = vadd.f32 %v317, %v395
        %v397 = vpop.f32.mrb[0].mxu0
        %398 = vmatprep.mubr.f32.mxu0 0.0
        %399 = vmatmul.mubr.f32.gmra.mrb[0].mxu0 %v291
        %v400 = vpop.f32.mrb[0].mxu0
        %v401 = vadd.f32 %v317, %v400
        %v402 = vpop.f32.mrb[0].mxu0
        %403 = vmatprep.mubr.f32.mxu0 0.0
        %404 = vmatmul.mubr.f32.gmra.mrb[0].mxu0 %v292
        %v405 = vpop.f32.mrb[0].mxu0
        %v406 = vadd.f32 %v317, %v405
        %v407 = vpop.f32.mrb[0].mxu0
        %408 = vmatprep.mubr.f32.mxu0 0.0
        %409 = vmatmul.mubr.f32.gmra.mrb[0].mxu0 %v293
        %v410 = vpop.f32.mrb[0].mxu0
        %v411 = vadd.f32 %v317, %v410
        %v412 = vpop.f32.mrb[0].mxu0
        %413 = vmatprep.mubr.f32.mxu0 0.0
        %414 = vmatmul.mubr.f32.gmra.mrb[0].mxu0 %v294
        %v415 = vpop.f32.mrb[0].mxu0
        %v416 = vadd.f32 %v317, %v415
        %v417 = vpop.f32.mrb[0].mxu0
        %418 = vmatprep.mubr.f32.mxu0 0.0
        %419 = vmatmul.mubr.f32.gmra.mrb[0].mxu0 %v295
        %v420 = vpop.f32.mrb[0].mxu0
        %v421 = vadd.f32 %v317, %v420
        %v422 = vpop.f32.mrb[0].mxu0
        %423 = vdwg.mxu0
        %424 = vadd.xlane.f32.xlu0 %v386
        %v425 = vpop.xlane.xlu0 %424
        %426 = vadd.xlane.f32.xlu0 %v391
        %v427 = vpop.xlane.xlu0 %426
        %428 = vadd.xlane.f32.xlu0 %v396
        %v429 = vpop.xlane.xlu0 %428
        %430 = vadd.xlane.f32.xlu0 %v401
        %v431 = vpop.xlane.xlu0 %430
        %432 = vadd.xlane.f32.xlu0 %v406
        %v433 = vpop.xlane.xlu0 %432
        %434 = vadd.xlane.f32.xlu0 %v411
        %v435 = vpop.xlane.xlu0 %434
        %436 = vadd.xlane.f32.xlu0 %v416
        %v437 = vpop.xlane.xlu0 %436
        %438 = vadd.xlane.f32.xlu0 %v421
        %v439 = vpop.xlane.xlu0 %438
        %v440 = vrcp.pop 128.0
        %v441 = vmul.f32 %v425, %v440
        %v442 = vmul.f32 %v427, %v440
        %v443 = vmul.f32 %v429, %v440
        %v444 = vmul.f32 %v431, %v440
        %v445 = vmul.f32 %v433, %v440
        %v446 = vmul.f32 %v435, %v440
        %v447 = vmul.f32 %v437, %v440
        %v448 = vmul.f32 %v439, %v440
        %v449 = vsub.f32 %v386, %v441
        %v450 = vsub.f32 %v391, %v442
        %v451 = vsub.f32 %v396, %v443
        %v452 = vsub.f32 %v401, %v444
        %v453 = vsub.f32 %v406, %v445
        %v454 = vsub.f32 %v411, %v446
        %v455 = vsub.f32 %v416, %v447
        %v456 = vsub.f32 %v421, %v448
        %v457 = vmul.f32 %v449, %v449
        %v458 = vmul.f32 %v450, %v450
        %v459 = vmul.f32 %v451, %v451
        %v460 = vmul.f32 %v452, %v452
        %v461 = vmul.f32 %v453, %v453
        %v462 = vmul.f32 %v454, %v454
        %v463 = vmul.f32 %v455, %v455
        %v464 = vmul.f32 %v456, %v456
        %465 = vadd.xlane.f32.xlu0 %v457
        %v466 = vpop.xlane.xlu0 %465
        %467 = vadd.xlane.f32.xlu0 %v458
        %v468 = vpop.xlane.xlu0 %467
        %469 = vadd.xlane.f32.xlu0 %v459
        %v470 = vpop.xlane.xlu0 %469
        %471 = vadd.xlane.f32.xlu0 %v460
        %v472 = vpop.xlane.xlu0 %471
        %473 = vadd.xlane.f32.xlu0 %v461
        %v474 = vpop.xlane.xlu0 %473
        %475 = vadd.xlane.f32.xlu0 %v462
        %v476 = vpop.xlane.xlu0 %475
        %477 = vadd.xlane.f32.xlu0 %v463
        %v478 = vpop.xlane.xlu0 %477
        %479 = vadd.xlane.f32.xlu0 %v464
        %v480 = vpop.xlane.xlu0 %479
        %v481 = vmul.f32 %v466, %v440
        %v482 = vmul.f32 %v468, %v440
        %v483 = vmul.f32 %v470, %v440
        %v484 = vmul.f32 %v472, %v440
        %v485 = vmul.f32 %v474, %v440
        %v486 = vmul.f32 %v476, %v440
        %v487 = vmul.f32 %v478, %v440
        %v488 = vmul.f32 %v480, %v440
        %v489 = vadd.f32 %v481, 1e-05
        %v490 = vadd.f32 %v482, 1e-05
        %v491 = vadd.f32 %v483, 1e-05
        %v492 = vadd.f32 %v484, 1e-05
        %v493 = vadd.f32 %v485, 1e-05
        %v494 = vadd.f32 %v486, 1e-05
        %v495 = vadd.f32 %v487, 1e-05
        %v496 = vadd.f32 %v488, 1e-05
        %v497 = vrsqrt.pop %v489
        %v498 = vrsqrt.pop %v490
        %v499 = vrsqrt.pop %v491
        %v500 = vrsqrt.pop %v492
        %v501 = vrsqrt.pop %v493
        %v502 = vrsqrt.pop %v494
        %v503 = vrsqrt.pop %v495
        %v504 = vrsqrt.pop %v496
        %v505 = vmul.f32 %v449, %v497
        %v506 = vmul.f32 %v450, %v498
        %v507 = vmul.f32 %v451, %v499
        %v508 = vmul.f32 %v452, %v500
        %v509 = vmul.f32 %v453, %v501
        %v510 = vmul.f32 %v454, %v502
        %v511 = vmul.f32 %v455, %v503
        %v512 = vmul.f32 %v456, %v504
        %v513 = vld [vmem:[%s4] sm:$0x1]
        %v515 = vlaneseq
        %v516 = vshrl.u32 %v515, 7
        %v517 = vsub.s32 0, %v516
        %v518 = vrot.slane %v513, %v517
        %v520 = vmul.f32 %v505, %v518
        %v521 = vmul.f32 %v506, %v518
        %v522 = vmul.f32 %v507, %v518
        %v523 = vmul.f32 %v508, %v518
        %v524 = vmul.f32 %v509, %v518
        %v525 = vmul.f32 %v510, %v518
        %v526 = vmul.f32 %v511, %v518
        %v527 = vmul.f32 %v512, %v518
        %v528 = vld [vmem:[%s5] sm:$0x1]
        %v530 = vlaneseq
        %v531 = vshrl.u32 %v530, 7
        %v532 = vsub.s32 0, %v531
        %v533 = vrot.slane %v528, %v532
        %v535 = vadd.f32 %v520, %v533
        %v536 = vadd.f32 %v521, %v533
        %v537 = vadd.f32 %v522, %v533
        %v538 = vadd.f32 %v523, %v533
        %v539 = vadd.f32 %v524, %v533
        %v540 = vadd.f32 %v525, %v533
        %v541 = vadd.f32 %v526, %v533
        %v542 = vadd.f32 %v527, %v533
        %s543 = sld [smem:[#allocation2]]
        %vm544 = vcmp.ge.f32.partialorder %v535, 0.0
        %vm545 = vcmp.ge.f32.partialorder %v536, 0.0
        %vm546 = vcmp.ge.f32.partialorder %v537, 0.0
        %vm547 = vcmp.ge.f32.partialorder %v538, 0.0
        %vm548 = vcmp.ge.f32.partialorder %v539, 0.0
        %vm549 = vcmp.ge.f32.partialorder %v540, 0.0
        %vm550 = vcmp.ge.f32.partialorder %v541, 0.0
        %vm551 = vcmp.ge.f32.partialorder %v542, 0.0
        %v552 = vstv %s543
        %v553 = vmul.f32 %v552, %v535
        %v554 = vmul.f32 %v552, %v536
        %v555 = vmul.f32 %v552, %v537
        %v556 = vmul.f32 %v552, %v538
        %v557 = vmul.f32 %v552, %v539
        %v558 = vmul.f32 %v552, %v540
        %v559 = vmul.f32 %v552, %v541
        %v560 = vmul.f32 %v552, %v542
        %v561 = vsel %vm544, %v535, %v553
        %v562 = vsel %vm545, %v536, %v554
        %v563 = vsel %vm546, %v537, %v555
        %v564 = vsel %vm547, %v538, %v556
        %v565 = vsel %vm548, %v539, %v557
        %v566 = vsel %vm549, %v540, %v558
        %v567 = vsel %vm550, %v541, %v559
        %v568 = vsel %vm551, %v542, %v560
        %569 = vst [vmem:[%s285] sm:$0xff] %v561
        %570 = vst [vmem:[%s285 + $0x8] sm:$0xff] %v562
        %571 = vst [vmem:[%s285 + $0x10] sm:$0xff] %v563
        %572 = vst [vmem:[%s285 + $0x18] sm:$0xff] %v564
        %573 = vst [vmem:[%s285 + $0x20] sm:$0xff] %v565
        %574 = vst [vmem:[%s285 + $0x28] sm:$0xff] %v566
        %575 = vst [vmem:[%s285 + $0x30] sm:$0xff] %v567
        %576 = vst [vmem:[%s285 + $0x38] sm:$0xff] %v568
        %s577 = sand.u32 %s164, 1
        %s578 = scalar_lea.sflag [#allocation5], %s577
        %s579 = sand.u32 %s164, 1
        %s580 = smul.addr %s579, 64
        %s581 = scalar_lea.vmem [#allocation8], %s580
        // Predicated region
        $region53: #{tpu_custom_call.1} parent=43 // pred_check
          %p582 = pneg %p174
        $region54: #{tpu_custom_call.1} parent=43 // pred_check_branch
          %584 = sbr.rel (%p582) target = $region56
        $region55: #{tpu_custom_call.1} parent=43 // pred_region
          %s585 = smul.u32 8, %s25
          %s587 = ssub.s32 1024, 1024
          %588 = vsyncadd %s578, %s587
          %s589 = smul.addr %s585, 128
          %s590 = scalar_lea.hbm %s6, %s589
          %s591 = sshll.u32 %s581, 4
          %s592 = int_to_ptr.vmem [resolvable:$true] %s591
          %597 = dma.vmem_to_hbm [thread:$0]  %s592, 1024, %s590, %s578, 128, 128, 8
        $region56: #{tpu_custom_call.1} parent=43 // pred_fallthru
          _
      $region44: #{tpu_custom_call.1} parent=5 // pred_fallthru
        _
      %p598 = scmp.le.s32.totalorder 2, %s20
      // Predicated region
      $region57: #{tpu_custom_call.1} parent=5 // pred_check
        %p599 = pneg %p598
      $region58: #{tpu_custom_call.1} parent=5 // pred_check_branch
        %601 = sbr.rel (%p599) target = $region60
      $region59: #{tpu_custom_call.1} parent=5 // pred_region
        %s602 = ssub.s32 %s20, 2
        // Predicated region
        $region61: #{tpu_custom_call.1} parent=59 // pred_check
          %p603 = pneg %p180
        $region62: #{tpu_custom_call.1} parent=59 // pred_check_branch
          %605 = sbr.rel (%p603) target = $region64
        $region63: #{tpu_custom_call.1} parent=59 // pred_region
          %s606 = sand.u32 %s165, 1
          %s607 = scalar_lea.sflag [#allocation5], %s606
          %s608 = sand.u32 %s165, 1
          %s609 = smul.addr %s608, 64
          %s610 = scalar_lea.vmem [#allocation8], %s609
          %611 = dma.done %s607, 1024
        $region64: #{tpu_custom_call.1} parent=59 // pred_fallthru
          _
      $region60: #{tpu_custom_call.1} parent=5 // pred_fallthru
        _
    $region6: #{tpu_custom_call.1} parent=1 // loop_footer
      %s24 = sadd.s32 1, %s20
    $region7: #{tpu_custom_call.1} parent=1 // loop_footer_branch
      %19 = sbr.rel target = $region3
    $region8: #{tpu_custom_call.1} parent=1 // loop_exit
      _
    %612 = vsyncpa [#allocation4], 1
    %s613 = scalar_lea.sflag [#allocation4], 1
    %614 = vsyncpa %s613, 1
    %615 = vsyncpa [#allocation7], 1
    %616 = vsyncpa [#allocation5], 1
    %s617 = scalar_lea.sflag [#allocation5], 1
    %618 = vsyncpa %s617, 1

</llo_original>
